<compile_context>
chip_gen: v7x
topology: tpu7x:2x2x1
jax: 0.10.0
libtpu: 0.0.40
codegen_flags: <defaults>
</compile_context>

<pallas_src>
import functools

import jax
import jax.numpy as jnp
from jax import lax
from jax.experimental import pallas as pl
from jax.experimental.pallas import tpu as pltpu


def _cat_bn_nchw_kernel(x1_ref, x2_ref, g_ref, b_ref, o_ref, *,
                        c1, c2, chunk, eps, inv_nl):
    """x1: (N, C1, L), x2: (N, C2, L), g/b: (C1+C2, 1), o: (N, C1+C2, L)."""

    def _normalize(x_view, g, b, o_view):
        # Training-mode BatchNorm with biased variance: one-pass sum /
        # sum-of-squares folded into per-channel scale & shift, then a single
        # fused x*scale + shift pass stored directly to the output slice.
        # (One-pass E[x^2]-E[x]^2 is fine in f32 with the clamp; for bf16 or
        # large-mean activations subtract a per-channel shift before squaring.)
        x = x_view[...].astype(jnp.float32)                       # (N, CH, L)
        s = jnp.sum(jnp.sum(x, axis=2, keepdims=True),
                    axis=0, keepdims=True)                        # (1, CH, 1)
        ss = jnp.sum(jnp.sum(x * x, axis=2, keepdims=True),
                     axis=0, keepdims=True)                       # (1, CH, 1)
        mean = s * inv_nl
        var = jnp.maximum(ss * inv_nl - mean * mean, 0.0)
        scale = g[None] * lax.rsqrt(var + eps)                    # (1, CH, 1)
        shift = b[None] - mean * scale                            # (1, CH, 1)
        o_view[...] = (x * scale + shift).astype(o_view.dtype)

    # x1 -> output channels [0, c1), processed in `chunk`-channel pieces to
    # keep the live vreg set small (~16 vregs per chunk at chunk=128, L=49).
    def _body(ci, carry):
        c0 = pl.multiple_of(ci * chunk, chunk)
        _normalize(x1_ref.at[:, pl.ds(c0, chunk), :],
                   g_ref[pl.ds(c0, chunk), :],
                   b_ref[pl.ds(c0, chunk), :],
                   o_ref.at[:, pl.ds(c0, chunk), :])
        return carry

    lax.fori_loop(0, c1 // chunk, _body, 0)

    # x2 -> output channels [c1, c1+c2): small (c2 = 32 -> 4 vregs), one shot.
    _normalize(x2_ref,
               g_ref[c1:c1 + c2, :],
               b_ref[c1:c1 + c2, :],
               o_ref.at[:, c1:c1 + c2, :])


def _pick_chunk(c):
    """Largest channel chunk (<=128, multiple of 8) that divides c."""
    for cand in (128, 64, 32, 16, 8):
        if c % cand == 0:
            return cand
    return c


def cat_batchnorm2d(x1, x2, gamma, beta, eps=1e-5):
    """BatchNorm2d(C1+C2)(cat([x1, x2], dim=1)) in train mode, NCHW I/O.

    x1: (N, C1, H, W), x2: (N, C2, H, W) -> (N, C1+C2, H, W).
    NCHW <-> (N, C, L) is a free reshape, so no layout ops surround the
    kernel (no transposes).
    """
    N, C1, H, W = x1.shape
    C2 = x2.shape[1]
    assert x2.shape == (N, C2, H, W)
    C = C1 + C2
    L = H * W

    x1f = x1.reshape(N, C1, L)
    x2f = x2.reshape(N, C2, L)
    g = gamma.reshape(C, 1).astype(jnp.float32)
    b = beta.reshape(C, 1).astype(jnp.float32)

    kernel = functools.partial(
        _cat_bn_nchw_kernel, c1=C1, c2=C2, chunk=_pick_chunk(C1),
        eps=float(eps), inv_nl=1.0 / float(N * L))

    # ~5 flops/element, one rsqrt per channel; bytes = read x1+x2 + write out
    # + params.  Lets XLA schedule neighbours around this tiny custom call.
    cost = pl.CostEstimate(
        flops=5 * N * L * C,
        transcendentals=C,
        bytes_accessed=2 * N * L * C * 4 + 2 * C * 4)

    out_flat = pl.pallas_call(
        kernel,
        out_shape=jax.ShapeDtypeStruct((N, C, L), x1.dtype),
        grid=(1,),
        in_specs=[
            pl.BlockSpec((N, C1, L), lambda i: (0, 0, 0)),
            pl.BlockSpec((N, C2, L), lambda i: (0, 0, 0)),
            pl.BlockSpec((C, 1), lambda i: (0, 0)),
            pl.BlockSpec((C, 1), lambda i: (0, 0)),
        ],
        out_specs=pl.BlockSpec((N, C, L), lambda i: (0, 0, 0)),
        compiler_params=pltpu.CompilerParams(
            dimension_semantics=("arbitrary",)),
        cost_estimate=cost,
    )(x1f, x2f, g, b)

    return out_flat.reshape(N, C, H, W)


def _reference(x1, x2, gamma, beta, eps=1e-5):
    x = jnp.concatenate([x1, x2], axis=1)
    mean = jnp.mean(x, axis=(0, 2, 3), keepdims=True)
    var = jnp.mean(jnp.square(x - mean), axis=(0, 2, 3), keepdims=True)
    g = gamma.reshape(1, -1, 1, 1)
    b = beta.reshape(1, -1, 1, 1)
    return (x - mean) * lax.rsqrt(var + eps) * g + b


if __name__ == "__main__":
    key = jax.random.PRNGKey(0)
    k1, k2, k3, k4 = jax.random.split(key, 4)

    # Shapes implied by the module: cat along channels gives 928 = 896 + 32.
    N, H, W = 1, 7, 7
    x481 = jax.random.normal(k1, (N, 896, H, W), dtype=jnp.float32)
    x488 = jax.random.normal(k2, (N, 32, H, W), dtype=jnp.float32)

    # BatchNorm2d(928) params, perturbed from the PyTorch defaults
    # (weight=1, bias=0) so the affine transform is actually exercised.
    gamma = 1.0 + 0.1 * jax.random.normal(k3, (928,), dtype=jnp.float32)
    beta = 0.1 * jax.random.normal(k4, (928,), dtype=jnp.float32)

    out = cat_batchnorm2d(x481, x488, gamma, beta)
    out = jax.block_until_ready(out)

    ref = _reference(x481, x488, gamma, beta)
    assert out.shape == (N, 928, H, W), out.shape
    assert jnp.allclose(out, ref, atol=1e-4, rtol=1e-4), (
        float(jnp.max(jnp.abs(out - ref))))

    print("KERNEL_OK")
</pallas_src>

<mosaic_0001>
module attributes {stable_mosaic.version = 11 : i64} {
  func.func @_cat_bn_nchw_kernel(%arg0: i32, %arg1: memref<1x896x49xf32, #tpu.memory_space<vmem>>, %arg2: memref<1x32x49xf32, #tpu.memory_space<vmem>>, %arg3: memref<928x1xf32, #tpu.memory_space<vmem>>, %arg4: memref<928x1xf32, #tpu.memory_space<vmem>>, %arg5: memref<1x928x49xf32, #tpu.memory_space<vmem>>) attributes {dimension_semantics = [#tpu.dimension_semantics<arbitrary>], iteration_bounds = array<i64: 1>, scalar_prefetch = 0 : i64, scratch_operands = 0 : i64, tpu.core_type = #tpu.core_type<tc>, window_params = [{pipeline_mode = #tpu.pipeline_mode<synchronous>, transform_indices = @transform_0, window_bounds = array<i64: 1, 896, 49>}, {pipeline_mode = #tpu.pipeline_mode<synchronous>, transform_indices = @transform_1, window_bounds = array<i64: 1, 32, 49>}, {pipeline_mode = #tpu.pipeline_mode<synchronous>, transform_indices = @transform_2, window_bounds = array<i64: 928, 1>}, {pipeline_mode = #tpu.pipeline_mode<synchronous>, transform_indices = @transform_3, window_bounds = array<i64: 928, 1>}, {pipeline_mode = #tpu.pipeline_mode<synchronous>, transform_indices = @transform_4, window_bounds = array<i64: 1, 928, 49>}]} {
    %c0_i32 = arith.constant 0 : i32
    %c7_i32 = arith.constant 7 : i32
    %0 = arith.addi %c0_i32, %c7_i32 : i32
    %c1_i32 = arith.constant 1 : i32
    scf.for %arg6 = %c0_i32 to %0 step %c1_i32  : i32 {
      %c128_i32 = arith.constant 128 : i32
      %34 = arith.muli %arg6, %c128_i32 : i32
      %35 = tpu.assume_multiple %34, 128 : i32
      %36 = arith.index_cast %35 : i32 to index
      %c0_16 = arith.constant 0 : index
      %37 = vector.load %arg3[%36, %c0_16] : memref<928x1xf32, #tpu.memory_space<vmem>>, vector<128x1xf32>
      %38 = arith.index_cast %35 : i32 to index
      %c0_17 = arith.constant 0 : index
      %39 = vector.load %arg4[%38, %c0_17] : memref<928x1xf32, #tpu.memory_space<vmem>>, vector<128x1xf32>
      %c0_18 = arith.constant 0 : index
      %40 = arith.index_cast %35 : i32 to index
      %c0_19 = arith.constant 0 : index
      %41 = vector.load %arg1[%c0_18, %40, %c0_19] : memref<1x896x49xf32, #tpu.memory_space<vmem>>, vector<1x128x49xf32>
      %cst_20 = arith.constant dense<0.000000e+00> : vector<1x128xf32>
      %42 = vector.multi_reduction <add>, %41, %cst_20 [2] : vector<1x128x49xf32> to vector<1x128xf32>
      %43 = vector.shape_cast %42 : vector<1x128xf32> to vector<1x128x1xf32>
      %cst_21 = arith.constant dense<0.000000e+00> : vector<128x1xf32>
      %44 = vector.multi_reduction <add>, %43, %cst_21 [0] : vector<1x128x1xf32> to vector<128x1xf32>
      %45 = vector.shape_cast %44 : vector<128x1xf32> to vector<1x128x1xf32>
      %46 = arith.mulf %41, %41 : vector<1x128x49xf32>
      %cst_22 = arith.constant dense<0.000000e+00> : vector<1x128xf32>
      %47 = vector.multi_reduction <add>, %46, %cst_22 [2] : vector<1x128x49xf32> to vector<1x128xf32>
      %48 = vector.shape_cast %47 : vector<1x128xf32> to vector<1x128x1xf32>
      %cst_23 = arith.constant dense<0.000000e+00> : vector<128x1xf32>
      %49 = vector.multi_reduction <add>, %48, %cst_23 [0] : vector<1x128x1xf32> to vector<128x1xf32>
      %50 = vector.shape_cast %49 : vector<128x1xf32> to vector<1x128x1xf32>
      %cst_24 = arith.constant 0.0204081628 : f32
      %51 = vector.broadcast %cst_24 : f32 to vector<1x128x1xf32>
      %52 = arith.mulf %45, %51 : vector<1x128x1xf32>
      %cst_25 = arith.constant 0.0204081628 : f32
      %53 = vector.broadcast %cst_25 : f32 to vector<1x128x1xf32>
      %54 = arith.mulf %50, %53 : vector<1x128x1xf32>
      %55 = arith.mulf %52, %52 : vector<1x128x1xf32>
      %56 = arith.subf %54, %55 : vector<1x128x1xf32>
      %cst_26 = arith.constant 0.000000e+00 : f32
      %57 = vector.broadcast %cst_26 : f32 to vector<1x128x1xf32>
      %58 = arith.maximumf %56, %57 : vector<1x128x1xf32>
      %59 = vector.shape_cast %37 : vector<128x1xf32> to vector<1x128x1xf32>
      %cst_27 = arith.constant 9.99999974E-6 : f32
      %60 = vector.broadcast %cst_27 : f32 to vector<1x128x1xf32>
      %61 = arith.addf %58, %60 : vector<1x128x1xf32>
      %62 = math.rsqrt %61 : vector<1x128x1xf32>
      %63 = arith.mulf %59, %62 : vector<1x128x1xf32>
      %64 = vector.shape_cast %39 : vector<128x1xf32> to vector<1x128x1xf32>
      %65 = arith.mulf %52, %63 : vector<1x128x1xf32>
      %66 = arith.subf %64, %65 : vector<1x128x1xf32>
      %67 = vector.broadcast %63 : vector<1x128x1xf32> to vector<1x128x49xf32>
      %68 = arith.mulf %41, %67 : vector<1x128x49xf32>
      %69 = vector.broadcast %66 : vector<1x128x1xf32> to vector<1x128x49xf32>
      %70 = arith.addf %68, %69 : vector<1x128x49xf32>
      %c0_28 = arith.constant 0 : index
      %71 = arith.index_cast %35 : i32 to index
      %c0_29 = arith.constant 0 : index
      %72 = vector.load %arg5[%c0_28, %71, %c0_29] : memref<1x928x49xf32, #tpu.memory_space<vmem>>, vector<1x128x49xf32>
      tpu.vector_store %arg5[%c0_28, %71, %c0_29], %70 {strides = array<i32>} : memref<1x928x49xf32, #tpu.memory_space<vmem>>, vector<1x128x49xf32>,
    }
    %c7_i32_0 = arith.constant 7 : i32
    %c896 = arith.constant 896 : index
    %c0 = arith.constant 0 : index
    %1 = vector.load %arg3[%c896, %c0] : memref<928x1xf32, #tpu.memory_space<vmem>>, vector<32x1xf32>
    %c896_1 = arith.constant 896 : index
    %c0_2 = arith.constant 0 : index
    %2 = vector.load %arg4[%c896_1, %c0_2] : memref<928x1xf32, #tpu.memory_space<vmem>>, vector<32x1xf32>
    %c0_3 = arith.constant 0 : index
    %c0_4 = arith.constant 0 : index
    %c0_5 = arith.constant 0 : index
    %3 = vector.load %arg2[%c0_3, %c0_4, %c0_5] : memref<1x32x49xf32, #tpu.memory_space<vmem>>, vector<1x32x49xf32>
    %cst = arith.constant dense<0.000000e+00> : vector<1x32xf32>
    %4 = vector.multi_reduction <add>, %3, %cst [2] : vector<1x32x49xf32> to vector<1x32xf32>
    %5 = vector.shape_cast %4 : vector<1x32xf32> to vector<1x32x1xf32>
    %cst_6 = arith.constant dense<0.000000e+00> : vector<32x1xf32>
    %6 = vector.multi_reduction <add>, %5, %cst_6 [0] : vector<1x32x1xf32> to vector<32x1xf32>
    %7 = vector.shape_cast %6 : vector<32x1xf32> to vector<1x32x1xf32>
    %8 = arith.mulf %3, %3 : vector<1x32x49xf32>
    %cst_7 = arith.constant dense<0.000000e+00> : vector<1x32xf32>
    %9 = vector.multi_reduction <add>, %8, %cst_7 [2] : vector<1x32x49xf32> to vector<1x32xf32>
    %10 = vector.shape_cast %9 : vector<1x32xf32> to vector<1x32x1xf32>
    %cst_8 = arith.constant dense<0.000000e+00> : vector<32x1xf32>
    %11 = vector.multi_reduction <add>, %10, %cst_8 [0] : vector<1x32x1xf32> to vector<32x1xf32>
    %12 = vector.shape_cast %11 : vector<32x1xf32> to vector<1x32x1xf32>
    %cst_9 = arith.constant 0.0204081628 : f32
    %13 = vector.broadcast %cst_9 : f32 to vector<1x32x1xf32>
    %14 = arith.mulf %7, %13 : vector<1x32x1xf32>
    %cst_10 = arith.constant 0.0204081628 : f32
    %15 = vector.broadcast %cst_10 : f32 to vector<1x32x1xf32>
    %16 = arith.mulf %12, %15 : vector<1x32x1xf32>
    %17 = arith.mulf %14, %14 : vector<1x32x1xf32>
    %18 = arith.subf %16, %17 : vector<1x32x1xf32>
    %cst_11 = arith.constant 0.000000e+00 : f32
    %19 = vector.broadcast %cst_11 : f32 to vector<1x32x1xf32>
    %20 = arith.maximumf %18, %19 : vector<1x32x1xf32>
    %21 = vector.shape_cast %1 : vector<32x1xf32> to vector<1x32x1xf32>
    %cst_12 = arith.constant 9.99999974E-6 : f32
    %22 = vector.broadcast %cst_12 : f32 to vector<1x32x1xf32>
    %23 = arith.addf %20, %22 : vector<1x32x1xf32>
    %24 = math.rsqrt %23 : vector<1x32x1xf32>
    %25 = arith.mulf %21, %24 : vector<1x32x1xf32>
    %26 = vector.shape_cast %2 : vector<32x1xf32> to vector<1x32x1xf32>
    %27 = arith.mulf %14, %25 : vector<1x32x1xf32>
    %28 = arith.subf %26, %27 : vector<1x32x1xf32>
    %29 = vector.broadcast %25 : vector<1x32x1xf32> to vector<1x32x49xf32>
    %30 = arith.mulf %3, %29 : vector<1x32x49xf32>
    %31 = vector.broadcast %28 : vector<1x32x1xf32> to vector<1x32x49xf32>
    %32 = arith.addf %30, %31 : vector<1x32x49xf32>
    %c0_13 = arith.constant 0 : index
    %c896_14 = arith.constant 896 : index
    %c0_15 = arith.constant 0 : index
    %33 = vector.load %arg5[%c0_13, %c896_14, %c0_15] : memref<1x928x49xf32, #tpu.memory_space<vmem>>, vector<1x32x49xf32>
    tpu.vector_store %arg5[%c0_13, %c896_14, %c0_15], %32 {strides = array<i32>} : memref<1x928x49xf32, #tpu.memory_space<vmem>>, vector<1x32x49xf32>,
    return
  }
  func.func @transform_0(%arg0: i32) -> (i32, i32, i32) {
    %c0_i32 = arith.constant 0 : i32
    %c0_i32_0 = arith.constant 0 : i32
    %c0_i32_1 = arith.constant 0 : i32
    %c0_i32_2 = arith.constant 0 : i32
    return %c0_i32, %c0_i32_0, %c0_i32_1 : i32, i32, i32
  }
  func.func @transform_1(%arg0: i32) -> (i32, i32, i32) {
    %c0_i32 = arith.constant 0 : i32
    %c0_i32_0 = arith.constant 0 : i32
    %c0_i32_1 = arith.constant 0 : i32
    %c0_i32_2 = arith.constant 0 : i32
    return %c0_i32, %c0_i32_0, %c0_i32_1 : i32, i32, i32
  }
  func.func @transform_2(%arg0: i32) -> (i32, i32) {
    %c0_i32 = arith.constant 0 : i32
    %c0_i32_0 = arith.constant 0 : i32
    %c0_i32_1 = arith.constant 0 : i32
    return %c0_i32, %c0_i32_0 : i32, i32
  }
  func.func @transform_3(%arg0: i32) -> (i32, i32) {
    %c0_i32 = arith.constant 0 : i32
    %c0_i32_0 = arith.constant 0 : i32
    %c0_i32_1 = arith.constant 0 : i32
    return %c0_i32, %c0_i32_0 : i32, i32
  }
  func.func @transform_4(%arg0: i32) -> (i32, i32, i32) {
    %c0_i32 = arith.constant 0 : i32
    %c0_i32_0 = arith.constant 0 : i32
    %c0_i32_1 = arith.constant 0 : i32
    %c0_i32_2 = arith.constant 0 : i32
    return %c0_i32, %c0_i32_0, %c0_i32_1 : i32, i32, i32
  }
}

</mosaic_0001>

<llo_original>
// kernel: tpu_custom_call.1
$region0: #{tpu_custom_call.1}
  #allocation0 [shape = 'u32[]', space=smem, size = 0x4, offset = 0x4, fixed_abs, tag = 'smem constant byte address 0x4 - core index']
  #allocation1 [shape = 'u32[144,128]{1,0:T(1,128)}', space=vmem, size = 0x12000, scoped, tag = 'internal scratch']
  %s0 = inlined_call_operand.vmem [shape: f32[1,896,49], index: 0, kind: input, shape index: {}]
  %s1 = inlined_call_operand.vmem [shape: f32[1,32,49], index: 1, kind: input, shape index: {}]
  %s2 = inlined_call_operand.vmem [shape: f32[928,1], index: 2, kind: input, shape index: {}]
  %s3 = inlined_call_operand.vmem [shape: f32[928,1], index: 3, kind: input, shape index: {}]
  %s4 = inlined_call_operand.vmem [shape: f32[1,928,49], index: 4, kind: output, shape index: {}]
  %s5 = sld [smem:[#allocation0]]
  $region33: #{tpu_custom_call.1} parent=0
    _
  %s7 = ssub.s32 1, %s5
  %s8 = scalar_select 0, %s7, %s5
  // Predicated region
  $region2: #{tpu_custom_call.1} parent=0 // pred_check
    _
  $region3: #{tpu_custom_call.1} parent=0 // pred_check_branch
    %10 = sbr.rel (0) target = $region5
  $region4: #{tpu_custom_call.1} parent=0 // pred_region
    _
  $region5: #{tpu_custom_call.1} parent=0 // pred_fallthru
    _
  // Predicated region
  $region6: #{tpu_custom_call.1} parent=0 // pred_check
    _
  $region7: #{tpu_custom_call.1} parent=0 // pred_check_branch
    %12 = sbr.rel (0) target = $region9
  $region8: #{tpu_custom_call.1} parent=0 // pred_region
    _
  $region9: #{tpu_custom_call.1} parent=0 // pred_fallthru
    _
  // Predicated region
  $region10: #{tpu_custom_call.1} parent=0 // pred_check
    _
  $region11: #{tpu_custom_call.1} parent=0 // pred_check_branch
    %14 = sbr.rel (0) target = $region13
  $region12: #{tpu_custom_call.1} parent=0 // pred_region
    _
  $region13: #{tpu_custom_call.1} parent=0 // pred_fallthru
    _
  // Predicated region
  $region14: #{tpu_custom_call.1} parent=0 // pred_check
    _
  $region15: #{tpu_custom_call.1} parent=0 // pred_check_branch
    %16 = sbr.rel (0) target = $region17
  $region16: #{tpu_custom_call.1} parent=0 // pred_region
    _
  $region17: #{tpu_custom_call.1} parent=0 // pred_fallthru
    _
  loop: start=0, step=1, limit=7
  $region18: #{tpu_custom_call.1} parent=0 // loop_pre_header
    _
  $region19: #{tpu_custom_call.1} parent=0 // loop_header
    %s18 = sphi 0, %s22
    %p19 = scmp.ge.s32.totalorder %s18, 7
  $region20: #{tpu_custom_call.1} parent=0 // loop_header_branch
    %21 = sbr.rel (%p19) target = $region24
  $region21: #{tpu_custom_call.1} parent=0 // loop_body
    %s23 = smul.u32 %s18, 128
    %s24 = scalar_lea.vmem %s2, %s23
    %v25 = vld [vmem:[%s24] sm:$0xff]
    %v26 = vld [vmem:[%s24 + $0x8] sm:$0xff]
    %v27 = vld [vmem:[%s24 + $0x10] sm:$0xff]
    %v28 = vld [vmem:[%s24 + $0x18] sm:$0xff]
    %v29 = vld [vmem:[%s24 + $0x20] sm:$0xff]
    %v30 = vld [vmem:[%s24 + $0x28] sm:$0xff]
    %v31 = vld [vmem:[%s24 + $0x30] sm:$0xff]
    %v32 = vld [vmem:[%s24 + $0x38] sm:$0xff]
    %v33 = vld [vmem:[%s24 + $0x40] sm:$0xff]
    %v34 = vld [vmem:[%s24 + $0x48] sm:$0xff]
    %v35 = vld [vmem:[%s24 + $0x50] sm:$0xff]
    %v36 = vld [vmem:[%s24 + $0x58] sm:$0xff]
    %v37 = vld [vmem:[%s24 + $0x60] sm:$0xff]
    %v38 = vld [vmem:[%s24 + $0x68] sm:$0xff]
    %v39 = vld [vmem:[%s24 + $0x70] sm:$0xff]
    %v40 = vld [vmem:[%s24 + $0x78] sm:$0xff]
    %s41 = scalar_lea.vmem %s3, %s23
    %v42 = vld [vmem:[%s41] sm:$0xff]
    %v43 = vld [vmem:[%s41 + $0x8] sm:$0xff]
    %v44 = vld [vmem:[%s41 + $0x10] sm:$0xff]
    %v45 = vld [vmem:[%s41 + $0x18] sm:$0xff]
    %v46 = vld [vmem:[%s41 + $0x20] sm:$0xff]
    %v47 = vld [vmem:[%s41 + $0x28] sm:$0xff]
    %v48 = vld [vmem:[%s41 + $0x30] sm:$0xff]
    %v49 = vld [vmem:[%s41 + $0x38] sm:$0xff]
    %v50 = vld [vmem:[%s41 + $0x40] sm:$0xff]
    %v51 = vld [vmem:[%s41 + $0x48] sm:$0xff]
    %v52 = vld [vmem:[%s41 + $0x50] sm:$0xff]
    %v53 = vld [vmem:[%s41 + $0x58] sm:$0xff]
    %v54 = vld [vmem:[%s41 + $0x60] sm:$0xff]
    %v55 = vld [vmem:[%s41 + $0x68] sm:$0xff]
    %v56 = vld [vmem:[%s41 + $0x70] sm:$0xff]
    %v57 = vld [vmem:[%s41 + $0x78] sm:$0xff]
    %s58 = scalar_lea.vmem %s0, %s23
    %v59 = vld [vmem:[%s58] sm:$0xff]
    %v60 = vld [vmem:[%s58 + $0x8] sm:$0xff]
    %v61 = vld [vmem:[%s58 + $0x10] sm:$0xff]
    %v62 = vld [vmem:[%s58 + $0x18] sm:$0xff]
    %v63 = vld [vmem:[%s58 + $0x20] sm:$0xff]
    %v64 = vld [vmem:[%s58 + $0x28] sm:$0xff]
    %v65 = vld [vmem:[%s58 + $0x30] sm:$0xff]
    %v66 = vld [vmem:[%s58 + $0x38] sm:$0xff]
    %v67 = vld [vmem:[%s58 + $0x40] sm:$0xff]
    %v68 = vld [vmem:[%s58 + $0x48] sm:$0xff]
    %v69 = vld [vmem:[%s58 + $0x50] sm:$0xff]
    %v70 = vld [vmem:[%s58 + $0x58] sm:$0xff]
    %v71 = vld [vmem:[%s58 + $0x60] sm:$0xff]
    %v72 = vld [vmem:[%s58 + $0x68] sm:$0xff]
    %v73 = vld [vmem:[%s58 + $0x70] sm:$0xff]
    %v74 = vld [vmem:[%s58 + $0x78] sm:$0xff]
    %vm75 = vcmask 400384
    %v76 = vsel %vm75, %v59, 0.0
    %77 = vadd.xlane.f32.xlu0 %v76
    %v78 = vpop.xlane.xlu0 %77
    %v79 = vsel %vm75, %v60, 0.0
    %80 = vadd.xlane.f32.xlu0 %v79
    %v81 = vpop.xlane.xlu0 %80
    %v82 = vsel %vm75, %v61, 0.0
    %83 = vadd.xlane.f32.xlu0 %v82
    %v84 = vpop.xlane.xlu0 %83
    %v85 = vsel %vm75, %v62, 0.0
    %86 = vadd.xlane.f32.xlu0 %v85
    %v87 = vpop.xlane.xlu0 %86
    %v88 = vsel %vm75, %v63, 0.0
    %89 = vadd.xlane.f32.xlu0 %v88
    %v90 = vpop.xlane.xlu0 %89
    %v91 = vsel %vm75, %v64, 0.0
    %92 = vadd.xlane.f32.xlu0 %v91
    %v93 = vpop.xlane.xlu0 %92
    %v94 = vsel %vm75, %v65, 0.0
    %95 = vadd.xlane.f32.xlu0 %v94
    %v96 = vpop.xlane.xlu0 %95
    %v97 = vsel %vm75, %v66, 0.0
    %98 = vadd.xlane.f32.xlu0 %v97
    %v99 = vpop.xlane.xlu0 %98
    %v100 = vsel %vm75, %v67, 0.0
    %101 = vadd.xlane.f32.xlu0 %v100
    %v102 = vpop.xlane.xlu0 %101
    %v103 = vsel %vm75, %v68, 0.0
    %104 = vadd.xlane.f32.xlu0 %v103
    %v105 = vpop.xlane.xlu0 %104
    %v106 = vsel %vm75, %v69, 0.0
    %107 = vadd.xlane.f32.xlu0 %v106
    %v108 = vpop.xlane.xlu0 %107
    %v109 = vsel %vm75, %v70, 0.0
    %110 = vadd.xlane.f32.xlu0 %v109
    %v111 = vpop.xlane.xlu0 %110
    %v112 = vsel %vm75, %v71, 0.0
    %113 = vadd.xlane.f32.xlu0 %v112
    %v114 = vpop.xlane.xlu0 %113
    %v115 = vsel %vm75, %v72, 0.0
    %116 = vadd.xlane.f32.xlu0 %v115
    %v117 = vpop.xlane.xlu0 %116
    %v118 = vsel %vm75, %v73, 0.0
    %119 = vadd.xlane.f32.xlu0 %v118
    %v120 = vpop.xlane.xlu0 %119
    %v121 = vsel %vm75, %v74, 0.0
    %122 = vadd.xlane.f32.xlu0 %v121
    %v123 = vpop.xlane.xlu0 %122
    %v124 = vadd.f32 %v78, 0.0
    %v125 = vadd.f32 %v81, 0.0
    %v126 = vadd.f32 %v84, 0.0
    %v127 = vadd.f32 %v87, 0.0
    %v128 = vadd.f32 %v90, 0.0
    %v129 = vadd.f32 %v93, 0.0
    %v130 = vadd.f32 %v96, 0.0
    %v131 = vadd.f32 %v99, 0.0
    %v132 = vadd.f32 %v102, 0.0
    %v133 = vadd.f32 %v105, 0.0
    %v134 = vadd.f32 %v108, 0.0
    %v135 = vadd.f32 %v111, 0.0
    %v136 = vadd.f32 %v114, 0.0
    %v137 = vadd.f32 %v117, 0.0
    %v138 = vadd.f32 %v120, 0.0
    %v139 = vadd.f32 %v123, 0.0
    %v140 = vmul.f32 %v59, %v59
    %v141 = vmul.f32 %v60, %v60
    %v142 = vmul.f32 %v61, %v61
    %v143 = vmul.f32 %v62, %v62
    %v144 = vmul.f32 %v63, %v63
    %v145 = vmul.f32 %v64, %v64
    %v146 = vmul.f32 %v65, %v65
    %v147 = vmul.f32 %v66, %v66
    %v148 = vmul.f32 %v67, %v67
    %v149 = vmul.f32 %v68, %v68
    %v150 = vmul.f32 %v69, %v69
    %v151 = vmul.f32 %v70, %v70
    %v152 = vmul.f32 %v71, %v71
    %v153 = vmul.f32 %v72, %v72
    %v154 = vmul.f32 %v73, %v73
    %v155 = vmul.f32 %v74, %v74
    %v156 = vsel %vm75, %v140, 0.0
    %157 = vadd.xlane.f32.xlu0 %v156
    %v158 = vpop.xlane.xlu0 %157
    %v159 = vsel %vm75, %v141, 0.0
    %160 = vadd.xlane.f32.xlu0 %v159
    %v161 = vpop.xlane.xlu0 %160
    %v162 = vsel %vm75, %v142, 0.0
    %163 = vadd.xlane.f32.xlu0 %v162
    %v164 = vpop.xlane.xlu0 %163
    %v165 = vsel %vm75, %v143, 0.0
    %166 = vadd.xlane.f32.xlu0 %v165
    %v167 = vpop.xlane.xlu0 %166
    %v168 = vsel %vm75, %v144, 0.0
    %169 = vadd.xlane.f32.xlu0 %v168
    %v170 = vpop.xlane.xlu0 %169
    %v171 = vsel %vm75, %v145, 0.0
    %172 = vadd.xlane.f32.xlu0 %v171
    %v173 = vpop.xlane.xlu0 %172
    %v174 = vsel %vm75, %v146, 0.0
    %175 = vadd.xlane.f32.xlu0 %v174
    %v176 = vpop.xlane.xlu0 %175
    %v177 = vsel %vm75, %v147, 0.0
    %178 = vadd.xlane.f32.xlu0 %v177
    %v179 = vpop.xlane.xlu0 %178
    %v180 = vsel %vm75, %v148, 0.0
    %181 = vadd.xlane.f32.xlu0 %v180
    %v182 = vpop.xlane.xlu0 %181
    %v183 = vsel %vm75, %v149, 0.0
    %184 = vadd.xlane.f32.xlu0 %v183
    %v185 = vpop.xlane.xlu0 %184
    %v186 = vsel %vm75, %v150, 0.0
    %187 = vadd.xlane.f32.xlu0 %v186
    %v188 = vpop.xlane.xlu0 %187
    %v189 = vsel %vm75, %v151, 0.0
    %190 = vadd.xlane.f32.xlu0 %v189
    %v191 = vpop.xlane.xlu0 %190
    %v192 = vsel %vm75, %v152, 0.0
    %193 = vadd.xlane.f32.xlu0 %v192
    %v194 = vpop.xlane.xlu0 %193
    %v195 = vsel %vm75, %v153, 0.0
    %196 = vadd.xlane.f32.xlu0 %v195
    %v197 = vpop.xlane.xlu0 %196
    %v198 = vsel %vm75, %v154, 0.0
    %199 = vadd.xlane.f32.xlu0 %v198
    %v200 = vpop.xlane.xlu0 %199
    %v201 = vsel %vm75, %v155, 0.0
    %202 = vadd.xlane.f32.xlu0 %v201
    %v203 = vpop.xlane.xlu0 %202
    %v204 = vadd.f32 %v158, 0.0
    %v205 = vadd.f32 %v161, 0.0
    %v206 = vadd.f32 %v164, 0.0
    %v207 = vadd.f32 %v167, 0.0
    %v208 = vadd.f32 %v170, 0.0
    %v209 = vadd.f32 %v173, 0.0
    %v210 = vadd.f32 %v176, 0.0
    %v211 = vadd.f32 %v179, 0.0
    %v212 = vadd.f32 %v182, 0.0
    %v213 = vadd.f32 %v185, 0.0
    %v214 = vadd.f32 %v188, 0.0
    %v215 = vadd.f32 %v191, 0.0
    %v216 = vadd.f32 %v194, 0.0
    %v217 = vadd.f32 %v197, 0.0
    %v218 = vadd.f32 %v200, 0.0
    %v219 = vadd.f32 %v203, 0.0
    %v220 = vmul.f32 %v124, 0.020408163
    %v221 = vmul.f32 %v125, 0.020408163
    %v222 = vmul.f32 %v126, 0.020408163
    %v223 = vmul.f32 %v127, 0.020408163
    %v224 = vmul.f32 %v128, 0.020408163
    %v225 = vmul.f32 %v129, 0.020408163
    %v226 = vmul.f32 %v130, 0.020408163
    %v227 = vmul.f32 %v131, 0.020408163
    %v228 = vmul.f32 %v132, 0.020408163
    %v229 = vmul.f32 %v133, 0.020408163
    %v230 = vmul.f32 %v134, 0.020408163
    %v231 = vmul.f32 %v135, 0.020408163
    %v232 = vmul.f32 %v136, 0.020408163
    %v233 = vmul.f32 %v137, 0.020408163
    %v234 = vmul.f32 %v138, 0.020408163
    %v235 = vmul.f32 %v139, 0.020408163
    %v236 = vmul.f32 %v204, 0.020408163
    %v237 = vmul.f32 %v205, 0.020408163
    %v238 = vmul.f32 %v206, 0.020408163
    %v239 = vmul.f32 %v207, 0.020408163
    %v240 = vmul.f32 %v208, 0.020408163
    %v241 = vmul.f32 %v209, 0.020408163
    %v242 = vmul.f32 %v210, 0.020408163
    %v243 = vmul.f32 %v211, 0.020408163
    %v244 = vmul.f32 %v212, 0.020408163
    %v245 = vmul.f32 %v213, 0.020408163
    %v246 = vmul.f32 %v214, 0.020408163
    %v247 = vmul.f32 %v215, 0.020408163
    %v248 = vmul.f32 %v216, 0.020408163
    %v249 = vmul.f32 %v217, 0.020408163
    %v250 = vmul.f32 %v218, 0.020408163
    %v251 = vmul.f32 %v219, 0.020408163
    %v252 = vmul.f32 %v220, %v220
    %v253 = vmul.f32 %v221, %v221
    %v254 = vmul.f32 %v222, %v222
    %v255 = vmul.f32 %v223, %v223
    %v256 = vmul.f32 %v224, %v224
    %v257 = vmul.f32 %v225, %v225
    %v258 = vmul.f32 %v226, %v226
    %v259 = vmul.f32 %v227, %v227
    %v260 = vmul.f32 %v228, %v228
    %v261 = vmul.f32 %v229, %v229
    %v262 = vmul.f32 %v230, %v230
    %v263 = vmul.f32 %v231, %v231
    %v264 = vmul.f32 %v232, %v232
    %v265 = vmul.f32 %v233, %v233
    %v266 = vmul.f32 %v234, %v234
    %v267 = vmul.f32 %v235, %v235
    %v268 = vsub.f32 %v236, %v252
    %v269 = vsub.f32 %v237, %v253
    %v270 = vsub.f32 %v238, %v254
    %v271 = vsub.f32 %v239, %v255
    %v272 = vsub.f32 %v240, %v256
    %v273 = vsub.f32 %v241, %v257
    %v274 = vsub.f32 %v242, %v258
    %v275 = vsub.f32 %v243, %v259
    %v276 = vsub.f32 %v244, %v260
    %v277 = vsub.f32 %v245, %v261
    %v278 = vsub.f32 %v246, %v262
    %v279 = vsub.f32 %v247, %v263
    %v280 = vsub.f32 %v248, %v264
    %v281 = vsub.f32 %v249, %v265
    %v282 = vsub.f32 %v250, %v266
    %v283 = vsub.f32 %v251, %v267
    %v284 = vmax.f32 %v268, 0.0
    %v285 = vmax.f32 %v269, 0.0
    %v286 = vmax.f32 %v270, 0.0
    %v287 = vmax.f32 %v271, 0.0
    %v288 = vmax.f32 %v272, 0.0
    %v289 = vmax.f32 %v273, 0.0
    %v290 = vmax.f32 %v274, 0.0
    %v291 = vmax.f32 %v275, 0.0
    %v292 = vmax.f32 %v276, 0.0
    %v293 = vmax.f32 %v277, 0.0
    %v294 = vmax.f32 %v278, 0.0
    %v295 = vmax.f32 %v279, 0.0
    %v296 = vmax.f32 %v280, 0.0
    %v297 = vmax.f32 %v281, 0.0
    %v298 = vmax.f32 %v282, 0.0
    %v299 = vmax.f32 %v283, 0.0
    %v300 = vadd.f32 %v284, 1e-05
    %v301 = vadd.f32 %v285, 1e-05
    %v302 = vadd.f32 %v286, 1e-05
    %v303 = vadd.f32 %v287, 1e-05
    %v304 = vadd.f32 %v288, 1e-05
    %v305 = vadd.f32 %v289, 1e-05
    %v306 = vadd.f32 %v290, 1e-05
    %v307 = vadd.f32 %v291, 1e-05
    %v308 = vadd.f32 %v292, 1e-05
    %v309 = vadd.f32 %v293, 1e-05
    %v310 = vadd.f32 %v294, 1e-05
    %v311 = vadd.f32 %v295, 1e-05
    %v312 = vadd.f32 %v296, 1e-05
    %v313 = vadd.f32 %v297, 1e-05
    %v314 = vadd.f32 %v298, 1e-05
    %v315 = vadd.f32 %v299, 1e-05
    %v316 = vrsqrt.pop %v300
    %v317 = vrsqrt.pop %v301
    %v318 = vrsqrt.pop %v302
    %v319 = vrsqrt.pop %v303
    %v320 = vrsqrt.pop %v304
    %v321 = vrsqrt.pop %v305
    %v322 = vrsqrt.pop %v306
    %v323 = vrsqrt.pop %v307
    %v324 = vrsqrt.pop %v308
    %v325 = vrsqrt.pop %v309
    %v326 = vrsqrt.pop %v310
    %v327 = vrsqrt.pop %v311
    %v328 = vrsqrt.pop %v312
    %v329 = vrsqrt.pop %v313
    %v330 = vrsqrt.pop %v314
    %v331 = vrsqrt.pop %v315
    %v332 = vmul.f32 %v25, %v316
    %v333 = vmul.f32 %v26, %v317
    %v334 = vmul.f32 %v27, %v318
    %v335 = vmul.f32 %v28, %v319
    %v336 = vmul.f32 %v29, %v320
    %v337 = vmul.f32 %v30, %v321
    %v338 = vmul.f32 %v31, %v322
    %v339 = vmul.f32 %v32, %v323
    %v340 = vmul.f32 %v33, %v324
    %v341 = vmul.f32 %v34, %v325
    %v342 = vmul.f32 %v35, %v326
    %v343 = vmul.f32 %v36, %v327
    %v344 = vmul.f32 %v37, %v328
    %v345 = vmul.f32 %v38, %v329
    %v346 = vmul.f32 %v39, %v330
    %v347 = vmul.f32 %v40, %v331
    %v348 = vmul.f32 %v220, %v332
    %v349 = vmul.f32 %v221, %v333
    %v350 = vmul.f32 %v222, %v334
    %v351 = vmul.f32 %v223, %v335
    %v352 = vmul.f32 %v224, %v336
    %v353 = vmul.f32 %v225, %v337
    %v354 = vmul.f32 %v226, %v338
    %v355 = vmul.f32 %v227, %v339
    %v356 = vmul.f32 %v228, %v340
    %v357 = vmul.f32 %v229, %v341
    %v358 = vmul.f32 %v230, %v342
    %v359 = vmul.f32 %v231, %v343
    %v360 = vmul.f32 %v232, %v344
    %v361 = vmul.f32 %v233, %v345
    %v362 = vmul.f32 %v234, %v346
    %v363 = vmul.f32 %v235, %v347
    %v364 = vsub.f32 %v42, %v348
    %v365 = vsub.f32 %v43, %v349
    %v366 = vsub.f32 %v44, %v350
    %v367 = vsub.f32 %v45, %v351
    %v368 = vsub.f32 %v46, %v352
    %v369 = vsub.f32 %v47, %v353
    %v370 = vsub.f32 %v48, %v354
    %v371 = vsub.f32 %v49, %v355
    %v372 = vsub.f32 %v50, %v356
    %v373 = vsub.f32 %v51, %v357
    %v374 = vsub.f32 %v52, %v358
    %v375 = vsub.f32 %v53, %v359
    %v376 = vsub.f32 %v54, %v360
    %v377 = vsub.f32 %v55, %v361
    %v378 = vsub.f32 %v56, %v362
    %v379 = vsub.f32 %v57, %v363
    %381 = vset.pattern.permute.xlu0 0
    %382 = vperm.xlu0 %381, %v332
    %v383 = vpop.permute.xlu0 %382
    %386 = vset.pattern.permute.xlu0 0
    %387 = vperm.xlu0 %386, %v333
    %v388 = vpop.permute.xlu0 %387
    %391 = vset.pattern.permute.xlu0 0
    %392 = vperm.xlu0 %391, %v334
    %v393 = vpop.permute.xlu0 %392
    %396 = vset.pattern.permute.xlu0 0
    %397 = vperm.xlu0 %396, %v335
    %v398 = vpop.permute.xlu0 %397
    %401 = vset.pattern.permute.xlu0 0
    %402 = vperm.xlu0 %401, %v336
    %v403 = vpop.permute.xlu0 %402
    %406 = vset.pattern.permute.xlu0 0
    %407 = vperm.xlu0 %406, %v337
    %v408 = vpop.permute.xlu0 %407
    %411 = vset.pattern.permute.xlu0 0
    %412 = vperm.xlu0 %411, %v338
    %v413 = vpop.permute.xlu0 %412
    %416 = vset.pattern.permute.xlu0 0
    %417 = vperm.xlu0 %416, %v339
    %v418 = vpop.permute.xlu0 %417
    %421 = vset.pattern.permute.xlu0 0
    %422 = vperm.xlu0 %421, %v340
    %v423 = vpop.permute.xlu0 %422
    %426 = vset.pattern.permute.xlu0 0
    %427 = vperm.xlu0 %426, %v341
    %v428 = vpop.permute.xlu0 %427
    %431 = vset.pattern.permute.xlu0 0
    %432 = vperm.xlu0 %431, %v342
    %v433 = vpop.permute.xlu0 %432
    %436 = vset.pattern.permute.xlu0 0
    %437 = vperm.xlu0 %436, %v343
    %v438 = vpop.permute.xlu0 %437
    %441 = vset.pattern.permute.xlu0 0
    %442 = vperm.xlu0 %441, %v344
    %v443 = vpop.permute.xlu0 %442
    %446 = vset.pattern.permute.xlu0 0
    %447 = vperm.xlu0 %446, %v345
    %v448 = vpop.permute.xlu0 %447
    %451 = vset.pattern.permute.xlu0 0
    %452 = vperm.xlu0 %451, %v346
    %v453 = vpop.permute.xlu0 %452
    %456 = vset.pattern.permute.xlu0 0
    %457 = vperm.xlu0 %456, %v347
    %v458 = vpop.permute.xlu0 %457
    %v460 = vmul.f32 %v59, %v383
    %v461 = vmul.f32 %v60, %v388
    %v462 = vmul.f32 %v61, %v393
    %v463 = vmul.f32 %v62, %v398
    %v464 = vmul.f32 %v63, %v403
    %v465 = vmul.f32 %v64, %v408
    %v466 = vmul.f32 %v65, %v413
    %v467 = vmul.f32 %v66, %v418
    %v468 = vmul.f32 %v67, %v423
    %v469 = vmul.f32 %v68, %v428
    %v470 = vmul.f32 %v69, %v433
    %v471 = vmul.f32 %v70, %v438
    %v472 = vmul.f32 %v71, %v443
    %v473 = vmul.f32 %v72, %v448
    %v474 = vmul.f32 %v73, %v453
    %v475 = vmul.f32 %v74, %v458
    %477 = vset.pattern.permute.xlu0 0
    %478 = vperm.xlu0 %477, %v364
    %v479 = vpop.permute.xlu0 %478
    %482 = vset.pattern.permute.xlu0 0
    %483 = vperm.xlu0 %482, %v365
    %v484 = vpop.permute.xlu0 %483
    %487 = vset.pattern.permute.xlu0 0
    %488 = vperm.xlu0 %487, %v366
    %v489 = vpop.permute.xlu0 %488
    %492 = vset.pattern.permute.xlu0 0
    %493 = vperm.xlu0 %492, %v367
    %v494 = vpop.permute.xlu0 %493
    %497 = vset.pattern.permute.xlu0 0
    %498 = vperm.xlu0 %497, %v368
    %v499 = vpop.permute.xlu0 %498
    %502 = vset.pattern.permute.xlu0 0
    %503 = vperm.xlu0 %502, %v369
    %v504 = vpop.permute.xlu0 %503
    %507 = vset.pattern.permute.xlu0 0
    %508 = vperm.xlu0 %507, %v370
    %v509 = vpop.permute.xlu0 %508
    %512 = vset.pattern.permute.xlu0 0
    %513 = vperm.xlu0 %512, %v371
    %v514 = vpop.permute.xlu0 %513
    %517 = vset.pattern.permute.xlu0 0
    %518 = vperm.xlu0 %517, %v372
    %v519 = vpop.permute.xlu0 %518
    %522 = vset.pattern.permute.xlu0 0
    %523 = vperm.xlu0 %522, %v373
    %v524 = vpop.permute.xlu0 %523
    %527 = vset.pattern.permute.xlu0 0
    %528 = vperm.xlu0 %527, %v374
    %v529 = vpop.permute.xlu0 %528
    %532 = vset.pattern.permute.xlu0 0
    %533 = vperm.xlu0 %532, %v375
    %v534 = vpop.permute.xlu0 %533
    %537 = vset.pattern.permute.xlu0 0
    %538 = vperm.xlu0 %537, %v376
    %v539 = vpop.permute.xlu0 %538
    %542 = vset.pattern.permute.xlu0 0
    %543 = vperm.xlu0 %542, %v377
    %v544 = vpop.permute.xlu0 %543
    %547 = vset.pattern.permute.xlu0 0
    %548 = vperm.xlu0 %547, %v378
    %v549 = vpop.permute.xlu0 %548
    %552 = vset.pattern.permute.xlu0 0
    %553 = vperm.xlu0 %552, %v379
    %v554 = vpop.permute.xlu0 %553
    %v556 = vadd.f32 %v460, %v479
    %v557 = vadd.f32 %v461, %v484
    %v558 = vadd.f32 %v462, %v489
    %v559 = vadd.f32 %v463, %v494
    %v560 = vadd.f32 %v464, %v499
    %v561 = vadd.f32 %v465, %v504
    %v562 = vadd.f32 %v466, %v509
    %v563 = vadd.f32 %v467, %v514
    %v564 = vadd.f32 %v468, %v519
    %v565 = vadd.f32 %v469, %v524
    %v566 = vadd.f32 %v470, %v529
    %v567 = vadd.f32 %v471, %v534
    %v568 = vadd.f32 %v472, %v539
    %v569 = vadd.f32 %v473, %v544
    %v570 = vadd.f32 %v474, %v549
    %v571 = vadd.f32 %v475, %v554
    %s572 = scalar_lea.vmem %s4, %s23
    %573 = vst.msk [vmem:[%s572] sm:$0xff] %vm75, %v556
    %574 = vst.msk [vmem:[%s572 + $0x8] sm:$0xff] %vm75, %v557
    %575 = vst.msk [vmem:[%s572 + $0x10] sm:$0xff] %vm75, %v558
    %576 = vst.msk [vmem:[%s572 + $0x18] sm:$0xff] %vm75, %v559
    %577 = vst.msk [vmem:[%s572 + $0x20] sm:$0xff] %vm75, %v560
    %578 = vst.msk [vmem:[%s572 + $0x28] sm:$0xff] %vm75, %v561
    %579 = vst.msk [vmem:[%s572 + $0x30] sm:$0xff] %vm75, %v562
    %580 = vst.msk [vmem:[%s572 + $0x38] sm:$0xff] %vm75, %v563
    %581 = vst.msk [vmem:[%s572 + $0x40] sm:$0xff] %vm75, %v564
    %582 = vst.msk [vmem:[%s572 + $0x48] sm:$0xff] %vm75, %v565
    %583 = vst.msk [vmem:[%s572 + $0x50] sm:$0xff] %vm75, %v566
    %584 = vst.msk [vmem:[%s572 + $0x58] sm:$0xff] %vm75, %v567
    %585 = vst.msk [vmem:[%s572 + $0x60] sm:$0xff] %vm75, %v568
    %586 = vst.msk [vmem:[%s572 + $0x68] sm:$0xff] %vm75, %v569
    %587 = vst.msk [vmem:[%s572 + $0x70] sm:$0xff] %vm75, %v570
    %588 = vst.msk [vmem:[%s572 + $0x78] sm:$0xff] %vm75, %v571
  $region22: #{tpu_custom_call.1} parent=0 // loop_footer
    %s22 = sadd.s32 1, %s18
  $region23: #{tpu_custom_call.1} parent=0 // loop_footer_branch
    %17 = sbr.rel target = $region19
  $region24: #{tpu_custom_call.1} parent=0 // loop_exit
    _
  %v589 = vld [vmem:[%s2 + $0x380] sm:$0xff]
  %v590 = vld [vmem:[%s2 + $0x388] sm:$0xff]
  %v591 = vld [vmem:[%s2 + $0x390] sm:$0xff]
  %v592 = vld [vmem:[%s2 + $0x398] sm:$0xff]
  %v593 = vld [vmem:[%s3 + $0x380] sm:$0xff]
  %v594 = vld [vmem:[%s3 + $0x388] sm:$0xff]
  %v595 = vld [vmem:[%s3 + $0x390] sm:$0xff]
  %v596 = vld [vmem:[%s3 + $0x398] sm:$0xff]
  %v597 = vld [vmem:[%s1] sm:$0xff]
  %v598 = vld [vmem:[%s1 + $0x8] sm:$0xff]
  %v599 = vld [vmem:[%s1 + $0x10] sm:$0xff]
  %v600 = vld [vmem:[%s1 + $0x18] sm:$0xff]
  %vm601 = vcmask 400384
  %v602 = vsel %vm601, %v597, 0.0
  %603 = vadd.xlane.f32.xlu0 %v602
  %v604 = vpop.xlane.xlu0 %603
  %v605 = vsel %vm601, %v598, 0.0
  %606 = vadd.xlane.f32.xlu0 %v605
  %v607 = vpop.xlane.xlu0 %606
  %v608 = vsel %vm601, %v599, 0.0
  %609 = vadd.xlane.f32.xlu0 %v608
  %v610 = vpop.xlane.xlu0 %609
  %v611 = vsel %vm601, %v600, 0.0
  %612 = vadd.xlane.f32.xlu0 %v611
  %v613 = vpop.xlane.xlu0 %612
  %v614 = vadd.f32 %v604, 0.0
  %v615 = vadd.f32 %v607, 0.0
  %v616 = vadd.f32 %v610, 0.0
  %v617 = vadd.f32 %v613, 0.0
  %v618 = vmul.f32 %v597, %v597
  %v619 = vmul.f32 %v598, %v598
  %v620 = vmul.f32 %v599, %v599
  %v621 = vmul.f32 %v600, %v600
  %v622 = vsel %vm601, %v618, 0.0
  %623 = vadd.xlane.f32.xlu0 %v622
  %v624 = vpop.xlane.xlu0 %623
  %v625 = vsel %vm601, %v619, 0.0
  %626 = vadd.xlane.f32.xlu0 %v625
  %v627 = vpop.xlane.xlu0 %626
  %v628 = vsel %vm601, %v620, 0.0
  %629 = vadd.xlane.f32.xlu0 %v628
  %v630 = vpop.xlane.xlu0 %629
  %v631 = vsel %vm601, %v621, 0.0
  %632 = vadd.xlane.f32.xlu0 %v631
  %v633 = vpop.xlane.xlu0 %632
  %v634 = vadd.f32 %v624, 0.0
  %v635 = vadd.f32 %v627, 0.0
  %v636 = vadd.f32 %v630, 0.0
  %v637 = vadd.f32 %v633, 0.0
  %v638 = vmul.f32 %v614, 0.020408163
  %v639 = vmul.f32 %v615, 0.020408163
  %v640 = vmul.f32 %v616, 0.020408163
  %v641 = vmul.f32 %v617, 0.020408163
  %v642 = vmul.f32 %v634, 0.020408163
  %v643 = vmul.f32 %v635, 0.020408163
  %v644 = vmul.f32 %v636, 0.020408163
  %v645 = vmul.f32 %v637, 0.020408163
  %v646 = vmul.f32 %v638, %v638
  %v647 = vmul.f32 %v639, %v639
  %v648 = vmul.f32 %v640, %v640
  %v649 = vmul.f32 %v641, %v641
  %v650 = vsub.f32 %v642, %v646
  %v651 = vsub.f32 %v643, %v647
  %v652 = vsub.f32 %v644, %v648
  %v653 = vsub.f32 %v645, %v649
  %v654 = vmax.f32 %v650, 0.0
  %v655 = vmax.f32 %v651, 0.0
  %v656 = vmax.f32 %v652, 0.0
  %v657 = vmax.f32 %v653, 0.0
  %v658 = vadd.f32 %v654, 1e-05
  %v659 = vadd.f32 %v655, 1e-05
  %v660 = vadd.f32 %v656, 1e-05
  %v661 = vadd.f32 %v657, 1e-05
  %v662 = vrsqrt.pop %v658
  %v663 = vrsqrt.pop %v659
  %v664 = vrsqrt.pop %v660
  %v665 = vrsqrt.pop %v661
  %v666 = vmul.f32 %v589, %v662
  %v667 = vmul.f32 %v590, %v663
  %v668 = vmul.f32 %v591, %v664
  %v669 = vmul.f32 %v592, %v665
  %v670 = vmul.f32 %v638, %v666
  %v671 = vmul.f32 %v639, %v667
  %v672 = vmul.f32 %v640, %v668
  %v673 = vmul.f32 %v641, %v669
  %v674 = vsub.f32 %v593, %v670
  %v675 = vsub.f32 %v594, %v671
  %v676 = vsub.f32 %v595, %v672
  %v677 = vsub.f32 %v596, %v673
  %679 = vset.pattern.permute.xlu0 0
  %680 = vperm.xlu0 %679, %v666
  %v681 = vpop.permute.xlu0 %680
  %684 = vset.pattern.permute.xlu0 0
  %685 = vperm.xlu0 %684, %v667
  %v686 = vpop.permute.xlu0 %685
  %689 = vset.pattern.permute.xlu0 0
  %690 = vperm.xlu0 %689, %v668
  %v691 = vpop.permute.xlu0 %690
  %694 = vset.pattern.permute.xlu0 0
  %695 = vperm.xlu0 %694, %v669
  %v696 = vpop.permute.xlu0 %695
  %v698 = vmul.f32 %v597, %v681
  %v699 = vmul.f32 %v598, %v686
  %v700 = vmul.f32 %v599, %v691
  %v701 = vmul.f32 %v600, %v696
  %703 = vset.pattern.permute.xlu0 0
  %704 = vperm.xlu0 %703, %v674
  %v705 = vpop.permute.xlu0 %704
  %708 = vset.pattern.permute.xlu0 0
  %709 = vperm.xlu0 %708, %v675
  %v710 = vpop.permute.xlu0 %709
  %713 = vset.pattern.permute.xlu0 0
  %714 = vperm.xlu0 %713, %v676
  %v715 = vpop.permute.xlu0 %714
  %718 = vset.pattern.permute.xlu0 0
  %719 = vperm.xlu0 %718, %v677
  %v720 = vpop.permute.xlu0 %719
  %v722 = vadd.f32 %v698, %v705
  %v723 = vadd.f32 %v699, %v710
  %v724 = vadd.f32 %v700, %v715
  %v725 = vadd.f32 %v701, %v720
  %726 = vst.msk [vmem:[%s4 + $0x380] sm:$0xff] %vm601, %v722
  %727 = vst.msk [vmem:[%s4 + $0x388] sm:$0xff] %vm601, %v723
  %728 = vst.msk [vmem:[%s4 + $0x390] sm:$0xff] %vm601, %v724
  %729 = vst.msk [vmem:[%s4 + $0x398] sm:$0xff] %vm601, %v725
  // Predicated region
  $region25: #{tpu_custom_call.1} parent=0 // pred_check
    _
  $region26: #{tpu_custom_call.1} parent=0 // pred_check_branch
    %731 = sbr.rel (0) target = $region28
  $region27: #{tpu_custom_call.1} parent=0 // pred_region
    _
  $region28: #{tpu_custom_call.1} parent=0 // pred_fallthru
    _
  // Predicated region
  $region29: #{tpu_custom_call.1} parent=0 // pred_check
    _
  $region30: #{tpu_custom_call.1} parent=0 // pred_check_branch
    %733 = sbr.rel (0) target = $region32
  $region31: #{tpu_custom_call.1} parent=0 // pred_region
    _
  $region32: #{tpu_custom_call.1} parent=0 // pred_fallthru
    _

</llo_original>
